<compile_context>
chip_gen: v7x
topology: tpu7x:2x2x1
jax: 0.10.0
libtpu: 0.0.40
codegen_flags: <defaults>
</compile_context>

<pallas_src>
import jax
import jax.numpy as jnp
import numpy as np
from jax.experimental import pallas as pl
from jax.experimental.pallas import tpu as pltpu


ALPHA_INIT_VAL = 5.0          # nn.Parameter(torch.tensor(5.0))
ALPHA_RESET_VAL = 1e-05       # registered buffer (unused in forward)


# ----------------------------------------------------------------------------
# PRIMARY (production) path: no kernel.  `1.0 * alpha` is an exact f32 identity.
# ----------------------------------------------------------------------------
def alpha_forward(alpha_param: jax.Array) -> jax.Array:
    """Equivalent of Alpha.forward(): returns alpha_val as a 0-d f32 scalar."""
    return jnp.asarray(alpha_param, dtype=jnp.float32).reshape(())


# ----------------------------------------------------------------------------
# Test-gated Pallas variant — only when a pallas_call boundary is required.
# ----------------------------------------------------------------------------
def _alpha_identity_kernel(alpha_ref, out_ref):
    # Scalar pass-through on the SMEM path; no multiply needed.
    out_ref[0] = alpha_ref[0]


@jax.jit
def alpha_forward_pallas(alpha_param: jax.Array) -> jax.Array:
    """Same semantics as alpha_forward(), but through a Pallas SMEM kernel."""
    alpha_1d = jnp.asarray(alpha_param, dtype=jnp.float32).reshape(1)
    out = pl.pallas_call(
        _alpha_identity_kernel,
        out_shape=jax.ShapeDtypeStruct((1,), jnp.float32),
        in_specs=[pl.BlockSpec(memory_space=pltpu.SMEM)],
        out_specs=pl.BlockSpec(memory_space=pltpu.SMEM),
        # Alias the (1,) input buffer to the output: drops the only remaining
        # data movement (the separate 4-byte output allocation/writeback).
        input_output_aliases={0: 0},
        # Accurate "this is free" estimate so XLA never serializes real work
        # behind this call.
        cost_estimate=pl.CostEstimate(flops=0, transcendentals=0,
                                      bytes_accessed=4),
    )(alpha_1d)
    return out[0]  # 0-d scalar, matching the PyTorch 0-d tensor output


# ----------------------------------------------------------------------------
# Recommended integration pattern: fold alpha into a consumer kernel via
# scalar prefetch (no standalone launch for alpha at all).
# ----------------------------------------------------------------------------
def _scale_by_alpha_kernel(alpha_ref, x_ref, o_ref):
    # alpha_ref lives in SMEM (scalar prefetch); broadcast-multiply the tile.
    o_ref[...] = x_ref[...] * alpha_ref[0]


def scale_by_alpha(x: jax.Array, alpha_param: jax.Array) -> jax.Array:
    """Example consumer: y = alpha * x with alpha passed via scalar prefetch."""
    alpha_1d = jnp.asarray(alpha_param, dtype=jnp.float32).reshape(1)
    M, N = x.shape
    return pl.pallas_call(
        _scale_by_alpha_kernel,
        out_shape=jax.ShapeDtypeStruct((M, N), x.dtype),
        grid_spec=pltpu.PrefetchScalarGridSpec(
            num_scalar_prefetch=1,
            grid=(1,),
            # index_maps receive (grid idx..., *prefetch_refs) positionally.
            in_specs=[pl.BlockSpec((M, N), lambda i, alpha: (0, 0))],
            out_specs=pl.BlockSpec((M, N), lambda i, alpha: (0, 0)),
        ),
    )(alpha_1d, x)


def reset_alpha(_alpha_param: jax.Array) -> jax.Array:
    """Equivalent of Alpha.reset_alpha(): returns the reset parameter value.

    JAX arrays are immutable, so instead of an in-place copy_ this returns the
    new parameter value for the caller to rebind.
    """
    # TODO(synk): in-place Parameter.copy_ has no JAX equivalent; caller rebinds.
    return jnp.asarray(ALPHA_RESET_VAL, dtype=jnp.float32)


if __name__ == "__main__":
    key = jax.random.PRNGKey(0)
    # Deterministic parameter init matching the module's __init__ (value 5.0).
    alpha_param = jnp.asarray(ALPHA_INIT_VAL, dtype=jnp.float32)

    # 1) Primary (kernel-free) forward.
    result = alpha_forward(alpha_param)
    jax.block_until_ready(result)

    # 2) Kernel-bound variant (test-gated), run once to exercise the Pallas path.
    result_kernel = alpha_forward_pallas(alpha_param)
    jax.block_until_ready(result_kernel)

    # 3) Scalar-prefetch consumer demo: alpha folded into a downstream kernel.
    x = jax.random.normal(key, (8, 128), dtype=jnp.float32)
    y = scale_by_alpha(x, alpha_param)
    jax.block_until_ready(y)

    expected = 1.0 * ALPHA_INIT_VAL
    assert result.dtype == jnp.float32 and result.shape == ()
    assert abs(float(result) - expected) < 1e-6, (float(result), expected)
    assert result_kernel.dtype == jnp.float32 and result_kernel.shape == ()
    assert abs(float(result_kernel) - expected) < 1e-6, (
        float(result_kernel), expected)
    np.testing.assert_allclose(np.asarray(y), np.asarray(x) * expected,
                               rtol=1e-6, atol=1e-6)

    # reset_alpha sanity check (not part of forward).
    new_alpha = reset_alpha(alpha_param)
    assert abs(float(new_alpha) - ALPHA_RESET_VAL) < 1e-12

    print("KERNEL_OK")
</pallas_src>

<mosaic_0001>
module attributes {stable_mosaic.version = 11 : i64} {
  func.func @_alpha_identity_kernel(%arg0: memref<1xf32, #tpu.memory_space<smem>>, %arg1: memref<1xf32, #tpu.memory_space<smem>>) attributes {dimension_semantics = [], scalar_prefetch = 0 : i64, scratch_operands = 0 : i64, tpu.core_type = #tpu.core_type<tc>} {
    %c0 = arith.constant 0 : index
    %0 = memref.load %arg0[%c0] : memref<1xf32, #tpu.memory_space<smem>>
    %c0_0 = arith.constant 0 : index
    %1 = memref.load %arg1[%c0_0] : memref<1xf32, #tpu.memory_space<smem>>
    memref.store %0, %arg1[%c0_0] : memref<1xf32, #tpu.memory_space<smem>>
    return
  }
}

</mosaic_0001>

<llo_original>
// kernel: alpha_forward_pallas.1
$region0: #{alpha_forward_pallas.1}
  #allocation0 [shape = 'u32[]', space=smem, size = 0x4, offset = 0x4, fixed_abs, tag = 'smem constant byte address 0x4 - core index']
  #allocation1 [shape = 'u32[144,128]{1,0:T(1,128)}', space=vmem, size = 0x12000, scoped, tag = 'internal scratch']
  #allocation2 [shape = 'f32[1]{0:T(128)S(6)}', space=smem, size = 0x200, scoped, tag = 'scoped memory for alpha_forward_pallas.1']
  %s0 = inlined_call_operand.<no memory space> [shape: f32[1], index: 0, kind: input, shape index: {}, may-alias: {0,1}]
  %s1 = inlined_call_operand.hbm [shape: f32[1], index: 1, kind: output, shape index: {}, may-alias: {0,1}]
  %s2 = sld [smem:[#allocation0]]
  $region14: #{alpha_forward_pallas.1} parent=0
    _
  %s4 = ssub.s32 1, %s2
  %s5 = scalar_select 0, %s4, %s2
  %6 = sst [smem:[#allocation2]] %s0
  $region1: #{alpha_forward_pallas.1} parent=0
    #allocation3 [shape = 'u8[512]{0}', space=smem, size = 0x200, scoped, tag = 'output window, operand 0, single buffered']
    #allocation4 [shape = 's32[1]{0}', space=sflag, size = 0x4, scoped, tag = 'scoped memory for alpha_forward_pallas.1']
    %7 = vsyncpa [#allocation4], 0
    // Predicated region
    $region2: #{alpha_forward_pallas.1} parent=1 // pred_check
      _
    $region3: #{alpha_forward_pallas.1} parent=1 // pred_check_branch
      %9 = sbr.rel (0) target = $region5
    $region4: #{alpha_forward_pallas.1} parent=1 // pred_region
      _
    $region5: #{alpha_forward_pallas.1} parent=1 // pred_fallthru
      _
    %s10 = sld [smem:[#allocation2]]
    %s11 = scalar_lea.smem [#allocation3], 0
    %12 = sst [smem:[%s11]] %s10
    // Predicated region
    $region6: #{alpha_forward_pallas.1} parent=1 // pred_check
      _
    $region7: #{alpha_forward_pallas.1} parent=1 // pred_check_branch
      %14 = sbr.rel (0) target = $region9
    $region8: #{alpha_forward_pallas.1} parent=1 // pred_region
      %s16 = ssub.s32 16, 16
      %17 = vsyncadd [#allocation4], %s16
      %20 = dma.smem_to_hbm [#allocation3], 16, %s1, [#allocation4]
    $region9: #{alpha_forward_pallas.1} parent=1 // pred_fallthru
      _
    // Predicated region
    $region10: #{alpha_forward_pallas.1} parent=1 // pred_check
      _
    $region11: #{alpha_forward_pallas.1} parent=1 // pred_check_branch
      %22 = sbr.rel (0) target = $region13
    $region12: #{alpha_forward_pallas.1} parent=1 // pred_region
      %23 = dma.done [#allocation4], 16
    $region13: #{alpha_forward_pallas.1} parent=1 // pred_fallthru
      _
    %24 = sfence
    %25 = vsyncpa [#allocation4], 1

</llo_original>
